<compile_context>
chip_gen: v6e
topology: v6e:2x2x1
jax: 0.10.0
libtpu: 0.0.40
codegen_flags: <defaults>
</compile_context>

<pallas_src>
import functools
import math

import jax
import jax.numpy as jnp
from jax import lax
from jax.experimental import pallas as pl
from jax.experimental.pallas import tpu as pltpu


def _round_up(a, m):
    return ((a + m - 1) // m) * m


def _shift_lanes(x, s):
    """out[..., p] = x[..., (p + s) % L] for a static int s.

    Written as slice+concatenate for unambiguous semantics; wrapped values are
    multiplied by 0 via the masked per-tap weights, so the wrap is harmless.
    (A single pltpu.roll is the one-op alternative.)
    """
    L = x.shape[-1]
    s = s % L
    if s == 0:
        return x
    return jnp.concatenate([x[..., s:], x[..., :s]], axis=-1)


def _branch_kernel(x_ref, w_eff_ref, shift_ref, w_pw_ref, b_pw_ref, o_ref,
                   *, B, W):
    """One grid step: B images in channel-major layout.

    x_ref    : (B, C, H*W)   input tile (NCHW flattened, lane-dense spatial)
    w_eff_ref: (9, C, H*W)   per-tap depthwise weights, BN-scale & halo-mask folded
    shift_ref: (C, 1)        folded shift = (b_dw - mean)*scale + beta
    w_pw_ref : (C, C)        1x1 conv weights (Cout, Cin)
    b_pw_ref : (C, 1)        1x1 conv bias
    o_ref    : (B, C, H*W)   output tile (already NCHW-flattened)
    """
    x = x_ref[...].astype(jnp.float32)                      # (B, C, HW)

    # Depthwise 3x3: 9 static lane shifts; halo zeros + BN scale live in w_eff.
    acc = None
    for dy in range(3):
        for dx in range(3):
            t = dy * 3 + dx
            s = (dy - 1) * W + (dx - 1)
            term = _shift_lanes(x, s) * w_eff_ref[t]        # (B,C,HW)*(C,HW)
            acc = term if acc is None else acc + term

    # Folded BatchNorm shift + depthwise bias, then exact GELU (torch default).
    y = acc + shift_ref[...]
    y = 0.5 * y * (1.0 + lax.erf(y * (1.0 / math.sqrt(2.0))))

    # 1x1 conv on the MXU, per image, result stored immediately (small live set).
    w_pw = w_pw_ref[...]
    b_pw = b_pw_ref[...]
    for b in range(B):
        ob = lax.dot_general(w_pw, y[b],
                             dimension_numbers=(((1,), (0,)), ((), ())),
                             preferred_element_type=jnp.float32)   # (C, HW)
        o_ref[b] = (ob + b_pw).astype(o_ref.dtype)


def _padded_bytes(*shape):
    """f32 VMEM footprint of a block after (8, 128) tile padding."""
    lead = 1
    for d in shape[:-2]:
        lead *= d
    return lead * _round_up(shape[-2], 8) * _round_up(shape[-1], 128) * 4


def simple_attention_branch(x_nchw, params, *, eps=1e-5):
    """Forward pass of SimpleAttentionBranch. Input/output in NCHW (PyTorch)."""
    N, C, H, W = x_nchw.shape
    HW = H * W

    # ---- fold eval-mode BN and the depthwise bias into weights / one shift --
    scale = params["bn_gamma"] / jnp.sqrt(params["bn_var"] + eps)          # (C,)
    w_dw = jnp.transpose(params["w_dw"][:, 0, :, :], (1, 2, 0)) * scale    # (3,3,C)
    shift = ((params["b_dw"] - params["bn_mean"]) * scale
             + params["bn_beta"]).reshape(C, 1).astype(jnp.float32)

    # ---- per-tap masked weights: zero-pad / halo semantics folded in --------
    h_idx = jnp.arange(HW, dtype=jnp.int32) // W
    w_idx = jnp.arange(HW, dtype=jnp.int32) % W
    taps = []
    for dy in range(3):
        for dx in range(3):
            hv = (h_idx + (dy - 1) >= 0) & (h_idx + (dy - 1) <= H - 1)
            wv = (w_idx + (dx - 1) >= 0) & (w_idx + (dx - 1) <= W - 1)
            mask = (hv & wv).astype(jnp.float32)                           # (HW,)
            taps.append(w_dw[dy, dx][:, None] * mask[None, :])             # (C,HW)
    w_eff = jnp.stack(taps).astype(jnp.float32)                            # (9,C,HW)

    w_pw = params["w_pw"][:, :, 0, 0].astype(jnp.float32)                  # (Cout,Cin)
    b_pw = params["b_pw"].reshape(C, 1).astype(jnp.float32)

    # ---- batch tile from a padded-layout-aware, per-generation VMEM budget --
    try:
        vmem_cap = int(pltpu.get_tpu_info().vmem_capacity_bytes)
    except Exception:
        vmem_cap = 64 << 20                      # v7x-safe fallback
    budget = min(vmem_cap // 2, 48 << 20)

    weight_bytes = 2 * (_padded_bytes(9, C, HW) + _padded_bytes(C, 1)
                        + _padded_bytes(C, C) + _padded_bytes(C, 1))

    def _estimate(b):
        blk = _padded_bytes(b, C, HW)
        # 2x double-buffered input + 2x output + ~4 live intermediates + weights
        return 8 * blk + weight_bytes

    B = 1
    while B * 2 <= min(16, N) and _estimate(B * 2) <= budget:
        B *= 2
    # Keep the grid length >= 2 when N >= 2 so v7x can shard across both cores.
    B = min(B, max(1, pl.cdiv(N, 2)))

    grid_n = pl.cdiv(N, B)
    n_pad = grid_n * B

    # Free metadata reshape of the NCHW tensor: no transpose, no spatial pad.
    x_flat = x_nchw.reshape(N, C, HW)
    if n_pad != N:
        # TODO(synk): tail handled by padding (one extra HBM copy of x); a
        #             masked tail block would avoid it for awkward N.
        x_flat = jnp.pad(x_flat, ((0, n_pad - N), (0, 0), (0, 0)))

    vmem_limit = int(min(budget, max(int(_estimate(B) * 1.5), 16 << 20)))

    kernel = functools.partial(_branch_kernel, B=B, W=W)

    out = pl.pallas_call(
        kernel,
        out_shape=jax.ShapeDtypeStruct((n_pad, C, HW), x_nchw.dtype),
        grid_spec=pltpu.PrefetchScalarGridSpec(
            num_scalar_prefetch=0,
            grid=(grid_n,),
            in_specs=[
                pl.BlockSpec((B, C, HW), lambda n: (n, 0, 0)),
                pl.BlockSpec((9, C, HW), lambda n: (0, 0, 0)),
                pl.BlockSpec((C, 1), lambda n: (0, 0)),
                pl.BlockSpec((C, C), lambda n: (0, 0)),
                pl.BlockSpec((C, 1), lambda n: (0, 0)),
            ],
            out_specs=pl.BlockSpec((B, C, HW), lambda n: (n, 0, 0)),
        ),
        compiler_params=pltpu.CompilerParams(
            dimension_semantics=("parallel",),
            vmem_limit_bytes=vmem_limit),
    )(x_flat, w_eff, shift, w_pw, b_pw)

    # Output is already NCHW-flattened; reshape is a free view, slice drops pad.
    return out[:N].reshape(N, C, H, W)


def init_params(key, dim):
    ks = jax.random.split(key, 8)
    return {
        "w_dw": jax.random.normal(ks[0], (dim, 1, 3, 3), jnp.float32) * 0.1,
        "b_dw": jax.random.normal(ks[1], (dim,), jnp.float32) * 0.1,
        "bn_gamma": 1.0 + 0.1 * jax.random.normal(ks[2], (dim,), jnp.float32),
        "bn_beta": 0.1 * jax.random.normal(ks[3], (dim,), jnp.float32),
        "bn_mean": 0.1 * jax.random.normal(ks[4], (dim,), jnp.float32),
        "bn_var": jax.random.uniform(ks[5], (dim,), jnp.float32, 0.5, 1.5),
        "w_pw": jax.random.normal(ks[6], (dim, dim, 1, 1), jnp.float32) * 0.1,
        "b_pw": jax.random.normal(ks[7], (dim,), jnp.float32) * 0.1,
    }


def _reference(x_nchw, params, eps=1e-5):
    """Pure-JAX reference (same eval-mode semantics) for a sanity check."""
    N, C, H, W = x_nchw.shape
    x = jnp.transpose(x_nchw, (0, 2, 3, 1))                      # NHWC
    k = jnp.transpose(params["w_dw"], (2, 3, 1, 0))              # (3,3,1,C)
    y = lax.conv_general_dilated(
        x, k, window_strides=(1, 1), padding="SAME",
        dimension_numbers=("NHWC", "HWIO", "NHWC"),
        feature_group_count=C) + params["b_dw"]
    y = (y - params["bn_mean"]) / jnp.sqrt(params["bn_var"] + eps)
    y = y * params["bn_gamma"] + params["bn_beta"]
    y = jax.nn.gelu(y, approximate=False)
    w = params["w_pw"][:, :, 0, 0]                               # (Cout, Cin)
    y = jnp.einsum("nhwc,oc->nhwo", y, w) + params["b_pw"]
    return jnp.transpose(y, (0, 3, 1, 2))


if __name__ == "__main__":
    key = jax.random.PRNGKey(0)
    kx, kp = jax.random.split(key)

    N, C, H, W = 2, 8, 16, 16
    x = jax.random.normal(kx, (N, C, H, W), jnp.float32)
    params = init_params(kp, C)

    out = simple_attention_branch(x, params)
    out = jax.block_until_ready(out)

    ref = _reference(x, params)
    assert out.shape == (N, C, H, W)
    err = float(jnp.max(jnp.abs(out - ref)))
    assert jnp.allclose(out, ref, atol=2e-3, rtol=2e-3), err

    print("KERNEL_OK")
</pallas_src>

<mosaic_0001>
module attributes {stable_mosaic.version = 11 : i64} {
  func.func @_branch_kernel(%arg0: i32, %arg1: memref<1x8x256xf32, #tpu.memory_space<vmem>>, %arg2: memref<9x8x256xf32, #tpu.memory_space<vmem>>, %arg3: memref<8x1xf32, #tpu.memory_space<vmem>>, %arg4: memref<8x8xf32, #tpu.memory_space<vmem>>, %arg5: memref<8x1xf32, #tpu.memory_space<vmem>>, %arg6: memref<1x8x256xf32, #tpu.memory_space<vmem>>) attributes {dimension_semantics = [#tpu.dimension_semantics<parallel>], iteration_bounds = array<i64: 2>, scalar_prefetch = 0 : i64, scratch_operands = 0 : i64, tpu.core_type = #tpu.core_type<tc>, window_params = [{transform_indices = @transform_0, window_bounds = array<i64: 1, 8, 256>}, {pipeline_mode = #tpu.pipeline_mode<synchronous>, transform_indices = @transform_1, window_bounds = array<i64: 9, 8, 256>}, {pipeline_mode = #tpu.pipeline_mode<synchronous>, transform_indices = @transform_2, window_bounds = array<i64: 8, 1>}, {pipeline_mode = #tpu.pipeline_mode<synchronous>, transform_indices = @transform_3, window_bounds = array<i64: 8, 8>}, {pipeline_mode = #tpu.pipeline_mode<synchronous>, transform_indices = @transform_4, window_bounds = array<i64: 8, 1>}, {transform_indices = @transform_5, window_bounds = array<i64: 1, 8, 256>}]} {
    %c0 = arith.constant 0 : index
    %c0_0 = arith.constant 0 : index
    %c0_1 = arith.constant 0 : index
    %0 = vector.load %arg1[%c0, %c0_0, %c0_1] : memref<1x8x256xf32, #tpu.memory_space<vmem>>, vector<1x8x256xf32>
    %1 = vector.extract_strided_slice %0 {offsets = [0, 0, 239], sizes = [1, 8, 17], strides = [1, 1, 1]} : vector<1x8x256xf32> to vector<1x8x17xf32>
    %2 = vector.extract_strided_slice %0 {offsets = [0, 0, 0], sizes = [1, 8, 239], strides = [1, 1, 1]} : vector<1x8x256xf32> to vector<1x8x239xf32>
    %3 = tpu.concatenate %1, %2 in 2 : vector<1x8x17xf32>, vector<1x8x239xf32> -> vector<1x8x256xf32>
    %c0_2 = arith.constant 0 : index
    %c0_3 = arith.constant 0 : index
    %c0_4 = arith.constant 0 : index
    %4 = vector.load %arg2[%c0_2, %c0_3, %c0_4] : memref<9x8x256xf32, #tpu.memory_space<vmem>>, vector<1x8x256xf32>
    %5 = vector.shape_cast %4 : vector<1x8x256xf32> to vector<8x256xf32>
    %6 = vector.shape_cast %5 : vector<8x256xf32> to vector<1x8x256xf32>
    %7 = arith.mulf %3, %6 : vector<1x8x256xf32>
    %8 = vector.extract_strided_slice %0 {offsets = [0, 0, 240], sizes = [1, 8, 16], strides = [1, 1, 1]} : vector<1x8x256xf32> to vector<1x8x16xf32>
    %9 = vector.extract_strided_slice %0 {offsets = [0, 0, 0], sizes = [1, 8, 240], strides = [1, 1, 1]} : vector<1x8x256xf32> to vector<1x8x240xf32>
    %10 = tpu.concatenate %8, %9 in 2 : vector<1x8x16xf32>, vector<1x8x240xf32> -> vector<1x8x256xf32>
    %c1 = arith.constant 1 : index
    %c0_5 = arith.constant 0 : index
    %c0_6 = arith.constant 0 : index
    %11 = vector.load %arg2[%c1, %c0_5, %c0_6] : memref<9x8x256xf32, #tpu.memory_space<vmem>>, vector<1x8x256xf32>
    %12 = vector.shape_cast %11 : vector<1x8x256xf32> to vector<8x256xf32>
    %13 = vector.shape_cast %12 : vector<8x256xf32> to vector<1x8x256xf32>
    %14 = arith.mulf %10, %13 : vector<1x8x256xf32>
    %15 = arith.addf %7, %14 : vector<1x8x256xf32>
    %16 = vector.extract_strided_slice %0 {offsets = [0, 0, 241], sizes = [1, 8, 15], strides = [1, 1, 1]} : vector<1x8x256xf32> to vector<1x8x15xf32>
    %17 = vector.extract_strided_slice %0 {offsets = [0, 0, 0], sizes = [1, 8, 241], strides = [1, 1, 1]} : vector<1x8x256xf32> to vector<1x8x241xf32>
    %18 = tpu.concatenate %16, %17 in 2 : vector<1x8x15xf32>, vector<1x8x241xf32> -> vector<1x8x256xf32>
    %c2 = arith.constant 2 : index
    %c0_7 = arith.constant 0 : index
    %c0_8 = arith.constant 0 : index
    %19 = vector.load %arg2[%c2, %c0_7, %c0_8] : memref<9x8x256xf32, #tpu.memory_space<vmem>>, vector<1x8x256xf32>
    %20 = vector.shape_cast %19 : vector<1x8x256xf32> to vector<8x256xf32>
    %21 = vector.shape_cast %20 : vector<8x256xf32> to vector<1x8x256xf32>
    %22 = arith.mulf %18, %21 : vector<1x8x256xf32>
    %23 = arith.addf %15, %22 : vector<1x8x256xf32>
    %24 = vector.extract_strided_slice %0 {offsets = [0, 0, 255], sizes = [1, 8, 1], strides = [1, 1, 1]} : vector<1x8x256xf32> to vector<1x8x1xf32>
    %25 = vector.extract_strided_slice %0 {offsets = [0, 0, 0], sizes = [1, 8, 255], strides = [1, 1, 1]} : vector<1x8x256xf32> to vector<1x8x255xf32>
    %26 = tpu.concatenate %24, %25 in 2 : vector<1x8x1xf32>, vector<1x8x255xf32> -> vector<1x8x256xf32>
    %c3 = arith.constant 3 : index
    %c0_9 = arith.constant 0 : index
    %c0_10 = arith.constant 0 : index
    %27 = vector.load %arg2[%c3, %c0_9, %c0_10] : memref<9x8x256xf32, #tpu.memory_space<vmem>>, vector<1x8x256xf32>
    %28 = vector.shape_cast %27 : vector<1x8x256xf32> to vector<8x256xf32>
    %29 = vector.shape_cast %28 : vector<8x256xf32> to vector<1x8x256xf32>
    %30 = arith.mulf %26, %29 : vector<1x8x256xf32>
    %31 = arith.addf %23, %30 : vector<1x8x256xf32>
    %c4 = arith.constant 4 : index
    %c0_11 = arith.constant 0 : index
    %c0_12 = arith.constant 0 : index
    %32 = vector.load %arg2[%c4, %c0_11, %c0_12] : memref<9x8x256xf32, #tpu.memory_space<vmem>>, vector<1x8x256xf32>
    %33 = vector.shape_cast %32 : vector<1x8x256xf32> to vector<8x256xf32>
    %34 = vector.shape_cast %33 : vector<8x256xf32> to vector<1x8x256xf32>
    %35 = arith.mulf %0, %34 : vector<1x8x256xf32>
    %36 = arith.addf %31, %35 : vector<1x8x256xf32>
    %37 = vector.extract_strided_slice %0 {offsets = [0, 0, 1], sizes = [1, 8, 255], strides = [1, 1, 1]} : vector<1x8x256xf32> to vector<1x8x255xf32>
    %38 = vector.extract_strided_slice %0 {offsets = [0, 0, 0], sizes = [1, 8, 1], strides = [1, 1, 1]} : vector<1x8x256xf32> to vector<1x8x1xf32>
    %39 = tpu.concatenate %37, %38 in 2 : vector<1x8x255xf32>, vector<1x8x1xf32> -> vector<1x8x256xf32>
    %c5 = arith.constant 5 : index
    %c0_13 = arith.constant 0 : index
    %c0_14 = arith.constant 0 : index
    %40 = vector.load %arg2[%c5, %c0_13, %c0_14] : memref<9x8x256xf32, #tpu.memory_space<vmem>>, vector<1x8x256xf32>
    %41 = vector.shape_cast %40 : vector<1x8x256xf32> to vector<8x256xf32>
    %42 = vector.shape_cast %41 : vector<8x256xf32> to vector<1x8x256xf32>
    %43 = arith.mulf %39, %42 : vector<1x8x256xf32>
    %44 = arith.addf %36, %43 : vector<1x8x256xf32>
    %45 = vector.extract_strided_slice %0 {offsets = [0, 0, 15], sizes = [1, 8, 241], strides = [1, 1, 1]} : vector<1x8x256xf32> to vector<1x8x241xf32>
    %46 = vector.extract_strided_slice %0 {offsets = [0, 0, 0], sizes = [1, 8, 15], strides = [1, 1, 1]} : vector<1x8x256xf32> to vector<1x8x15xf32>
    %47 = tpu.concatenate %45, %46 in 2 : vector<1x8x241xf32>, vector<1x8x15xf32> -> vector<1x8x256xf32>
    %c6 = arith.constant 6 : index
    %c0_15 = arith.constant 0 : index
    %c0_16 = arith.constant 0 : index
    %48 = vector.load %arg2[%c6, %c0_15, %c0_16] : memref<9x8x256xf32, #tpu.memory_space<vmem>>, vector<1x8x256xf32>
    %49 = vector.shape_cast %48 : vector<1x8x256xf32> to vector<8x256xf32>
    %50 = vector.shape_cast %49 : vector<8x256xf32> to vector<1x8x256xf32>
    %51 = arith.mulf %47, %50 : vector<1x8x256xf32>
    %52 = arith.addf %44, %51 : vector<1x8x256xf32>
    %53 = vector.extract_strided_slice %0 {offsets = [0, 0, 16], sizes = [1, 8, 240], strides = [1, 1, 1]} : vector<1x8x256xf32> to vector<1x8x240xf32>
    %54 = vector.extract_strided_slice %0 {offsets = [0, 0, 0], sizes = [1, 8, 16], strides = [1, 1, 1]} : vector<1x8x256xf32> to vector<1x8x16xf32>
    %55 = tpu.concatenate %53, %54 in 2 : vector<1x8x240xf32>, vector<1x8x16xf32> -> vector<1x8x256xf32>
    %c7 = arith.constant 7 : index
    %c0_17 = arith.constant 0 : index
    %c0_18 = arith.constant 0 : index
    %56 = vector.load %arg2[%c7, %c0_17, %c0_18] : memref<9x8x256xf32, #tpu.memory_space<vmem>>, vector<1x8x256xf32>
    %57 = vector.shape_cast %56 : vector<1x8x256xf32> to vector<8x256xf32>
    %58 = vector.shape_cast %57 : vector<8x256xf32> to vector<1x8x256xf32>
    %59 = arith.mulf %55, %58 : vector<1x8x256xf32>
    %60 = arith.addf %52, %59 : vector<1x8x256xf32>
    %61 = vector.extract_strided_slice %0 {offsets = [0, 0, 17], sizes = [1, 8, 239], strides = [1, 1, 1]} : vector<1x8x256xf32> to vector<1x8x239xf32>
    %62 = vector.extract_strided_slice %0 {offsets = [0, 0, 0], sizes = [1, 8, 17], strides = [1, 1, 1]} : vector<1x8x256xf32> to vector<1x8x17xf32>
    %63 = tpu.concatenate %61, %62 in 2 : vector<1x8x239xf32>, vector<1x8x17xf32> -> vector<1x8x256xf32>
    %c8 = arith.constant 8 : index
    %c0_19 = arith.constant 0 : index
    %c0_20 = arith.constant 0 : index
    %64 = vector.load %arg2[%c8, %c0_19, %c0_20] : memref<9x8x256xf32, #tpu.memory_space<vmem>>, vector<1x8x256xf32>
    %65 = vector.shape_cast %64 : vector<1x8x256xf32> to vector<8x256xf32>
    %66 = vector.shape_cast %65 : vector<8x256xf32> to vector<1x8x256xf32>
    %67 = arith.mulf %63, %66 : vector<1x8x256xf32>
    %68 = arith.addf %60, %67 : vector<1x8x256xf32>
    %c0_21 = arith.constant 0 : index
    %c0_22 = arith.constant 0 : index
    %69 = vector.load %arg3[%c0_21, %c0_22] : memref<8x1xf32, #tpu.memory_space<vmem>>, vector<8x1xf32>
    %70 = vector.shape_cast %69 : vector<8x1xf32> to vector<1x8x1xf32>
    %71 = vector.broadcast %70 : vector<1x8x1xf32> to vector<1x8x256xf32>
    %72 = arith.addf %68, %71 : vector<1x8x256xf32>
    %cst = arith.constant 5.000000e-01 : f32
    %73 = vector.broadcast %cst : f32 to vector<1x8x256xf32>
    %74 = arith.mulf %73, %72 : vector<1x8x256xf32>
    %cst_23 = arith.constant 0.707106769 : f32
    %75 = vector.broadcast %cst_23 : f32 to vector<1x8x256xf32>
    %76 = arith.mulf %72, %75 : vector<1x8x256xf32>
    %77 = math.erf %76 : vector<1x8x256xf32>
    %cst_24 = arith.constant 1.000000e+00 : f32
    %78 = vector.broadcast %cst_24 : f32 to vector<1x8x256xf32>
    %79 = arith.addf %78, %77 : vector<1x8x256xf32>
    %80 = arith.mulf %74, %79 : vector<1x8x256xf32>
    %c0_25 = arith.constant 0 : index
    %c0_26 = arith.constant 0 : index
    %81 = vector.load %arg4[%c0_25, %c0_26] : memref<8x8xf32, #tpu.memory_space<vmem>>, vector<8x8xf32>
    %c0_27 = arith.constant 0 : index
    %c0_28 = arith.constant 0 : index
    %82 = vector.load %arg5[%c0_27, %c0_28] : memref<8x1xf32, #tpu.memory_space<vmem>>, vector<8x1xf32>
    %83 = vector.shape_cast %80 : vector<1x8x256xf32> to vector<8x256xf32>
    %cst_29 = arith.constant dense<0.000000e+00> : vector<8x256xf32>
    %84 = tpu.matmul %81, %83, %cst_29 {dimension_numbers = #tpu.dot_dimension_numbers<[1], [0], [0], [1], [0, 0, 1, 1], [], []>} : vector<8x8xf32>, vector<8x256xf32>, vector<8x256xf32> -> vector<8x256xf32>
    %85 = vector.broadcast %82 : vector<8x1xf32> to vector<8x256xf32>
    %86 = arith.addf %84, %85 : vector<8x256xf32>
    %c0_30 = arith.constant 0 : index
    %c0_31 = arith.constant 0 : index
    %c0_32 = arith.constant 0 : index
    %87 = vector.load %arg6[%c0_30, %c0_31, %c0_32] : memref<1x8x256xf32, #tpu.memory_space<vmem>>, vector<1x8x256xf32>
    %88 = vector.shape_cast %87 : vector<1x8x256xf32> to vector<8x256xf32>
    %89 = vector.shape_cast %86 : vector<8x256xf32> to vector<1x8x256xf32>
    tpu.vector_store %arg6[%c0_30, %c0_31, %c0_32], %89 {strides = array<i32>} : memref<1x8x256xf32, #tpu.memory_space<vmem>>, vector<1x8x256xf32>,
    return
  }
  func.func @transform_0(%arg0: i32) -> (i32, i32, i32) {
    %c0_i32 = arith.constant 0 : i32
    %c0_i32_0 = arith.constant 0 : i32
    %c0_i32_1 = arith.constant 0 : i32
    return %arg0, %c0_i32, %c0_i32_0 : i32, i32, i32
  }
  func.func @transform_1(%arg0: i32) -> (i32, i32, i32) {
    %c0_i32 = arith.constant 0 : i32
    %c0_i32_0 = arith.constant 0 : i32
    %c0_i32_1 = arith.constant 0 : i32
    %c0_i32_2 = arith.constant 0 : i32
    return %c0_i32, %c0_i32_0, %c0_i32_1 : i32, i32, i32
  }
  func.func @transform_2(%arg0: i32) -> (i32, i32) {
    %c0_i32 = arith.constant 0 : i32
    %c0_i32_0 = arith.constant 0 : i32
    %c0_i32_1 = arith.constant 0 : i32
    return %c0_i32, %c0_i32_0 : i32, i32
  }
  func.func @transform_3(%arg0: i32) -> (i32, i32) {
    %c0_i32 = arith.constant 0 : i32
    %c0_i32_0 = arith.constant 0 : i32
    %c0_i32_1 = arith.constant 0 : i32
    return %c0_i32, %c0_i32_0 : i32, i32
  }
  func.func @transform_4(%arg0: i32) -> (i32, i32) {
    %c0_i32 = arith.constant 0 : i32
    %c0_i32_0 = arith.constant 0 : i32
    %c0_i32_1 = arith.constant 0 : i32
    return %c0_i32, %c0_i32_0 : i32, i32
  }
  func.func @transform_5(%arg0: i32) -> (i32, i32, i32) {
    %c0_i32 = arith.constant 0 : i32
    %c0_i32_0 = arith.constant 0 : i32
    %c0_i32_1 = arith.constant 0 : i32
    return %arg0, %c0_i32, %c0_i32_0 : i32, i32, i32
  }
}

</mosaic_0001>

<llo_original>
// kernel: tpu_custom_call.1
$region0: #{tpu_custom_call.1}
  #allocation0 [shape = 'u32[]', space=smem, size = 0x4, offset = 0x4, fixed_abs, tag = 'smem constant byte address 0x4 - core index']
  #allocation1 [shape = 'u32[144,128]{1,0:T(1,128)}', space=vmem, size = 0x12000, scoped, tag = 'internal scratch']
  %s0 = inlined_call_operand.hbm [shape: f32[2,8,256], index: 0, kind: input, shape index: {}]
  %s1 = inlined_call_operand.hbm [shape: f32[9,8,256], index: 1, kind: input, shape index: {}]
  %s2 = inlined_call_operand.vmem [shape: f32[8,1], index: 2, kind: input, shape index: {}]
  %s3 = inlined_call_operand.vmem [shape: f32[8,8], index: 3, kind: input, shape index: {}]
  %s4 = inlined_call_operand.vmem [shape: f32[8,1], index: 4, kind: input, shape index: {}]
  %s5 = inlined_call_operand.hbm [shape: f32[2,8,256], index: 5, kind: output, shape index: {}]
  %s6 = sld [smem:[#allocation0]]
  $region61: #{tpu_custom_call.1} parent=0
    _
  %s8 = ssub.s32 1, %s6
  %s9 = scalar_select 0, %s8, %s6
  $region1: #{tpu_custom_call.1} parent=0
    #allocation2 [shape = 'u8[16384]{0}', space=vmem, size = 0x4000, scoped, tag = 'input window, operand 0']
    #allocation3 [shape = 's32[2]{0}', space=sflag, size = 0x8, scoped, tag = 'scoped memory for tpu_custom_call.1']
    #allocation4 [shape = 's32[2]{0}', space=sflag, size = 0x8, scoped, tag = 'scoped memory for tpu_custom_call.1']
    #allocation5 [shape = 'u8[73728]{0}', space=vmem, size = 0x12000, scoped, tag = 'input window, operand 1, single buffered']
    #allocation6 [shape = 's32[1]{0}', space=sflag, size = 0x4, scoped, tag = 'scoped memory for tpu_custom_call.1']
    #allocation7 [shape = 'u8[16384]{0}', space=vmem, size = 0x4000, scoped, tag = 'output window, operand 0']
    %10 = vsyncpa [#allocation3], 0
    %s11 = scalar_lea.sflag [#allocation3], 1
    %12 = vsyncpa %s11, 0
    %13 = vsyncpa [#allocation6], 0
    %14 = vsyncpa [#allocation4], 0
    %s15 = scalar_lea.sflag [#allocation4], 1
    %16 = vsyncpa %s15, 0
    loop: start=0, step=1, limit=4
    $region2: #{tpu_custom_call.1} parent=1 // loop_pre_header
      _
    $region3: #{tpu_custom_call.1} parent=1 // loop_header
      %s18 = sphi 0, %s22
      %p19 = scmp.ge.s32.totalorder %s18, 4
      %s28 = sphi 0, %s30
      %s31 = sphi 0, %s28
      %s32 = sphi 0, %s31
      %s48 = sphi 0, %s32
      %s52 = sphi 0, %s52
      %s54 = sphi 0, %s52
      %s55 = sphi 0, %s54
      %s69 = sphi 0, %s55
      %s73 = sphi 0, %s73
      %s75 = sphi 0, %s73
      %s76 = sphi 0, %s75
      %s90 = sphi 0, %s76
      %s94 = sphi 0, %s94
      %s96 = sphi 0, %s94
      %s97 = sphi 0, %s96
      %s111 = sphi 0, %s97
      %s115 = sphi 0, %s115
      %s117 = sphi 0, %s115
      %s118 = sphi 0, %s117
      %s132 = sphi 0, %s118
      %s138 = sphi 0, %s140
      %s141 = sphi 0, %s138
      %s142 = sphi 0, %s141
      %s158 = sphi 0, %s142
    $region4: #{tpu_custom_call.1} parent=1 // loop_header_branch
      %21 = sbr.rel (%p19) target = $region8
    $region5: #{tpu_custom_call.1} parent=1 // loop_body
      %s23 = ssub.s32 %s18, 1
      %s24 = ssub.s32 %s18, 2
      %s25 = sadd.s32 %s18, 1
      %s26 = ssub.s32 %s18, %s25
      %p27 = scmp.eq.s32.totalorder %s26, 0
      %s29 = sadd.s32 %s28, 1
      %s30 = scalar_select %p27, %s28, %s29
      %p33 = pneg %p27
      %p34 = scmp.eq.s32.totalorder %s18, 1
      %p35 = por %p33, %p34
      %p36 = scmp.ne.s32.totalorder %s28, %s31
      %p37 = scmp.eq.s32.totalorder %s18, 0
      %p38 = por %p36, %p37
      %p39 = scmp.ne.s32.totalorder %s28, %s31
      %p40 = scmp.eq.s32.totalorder %s23, 1
      %p41 = por %p39, %p40
      %p42 = scmp.ne.s32.totalorder %s31, %s32
      %p43 = scmp.eq.s32.totalorder %s23, 0
      %p44 = por %p42, %p43
      %p45 = scmp.ne.s32.totalorder %s31, %s32
      %p46 = scmp.eq.s32.totalorder %s24, 1
      %p47 = por %p45, %p46
      %p49 = scmp.ne.s32.totalorder %s32, %s48
      %p50 = scmp.eq.s32.totalorder %s24, 0
      %p51 = por %p49, %p50
      %s53 = sadd.s32 %s52, 1
      %p56 = scmp.eq.s32.totalorder %s18, 1
      %p57 = scmp.ne.s32.totalorder %s52, %s54
      %p58 = scmp.eq.s32.totalorder %s18, 0
      %p59 = por %p57, %p58
      %p60 = scmp.ne.s32.totalorder %s52, %s54
      %p61 = scmp.eq.s32.totalorder %s23, 1
      %p62 = por %p60, %p61
      %p63 = scmp.ne.s32.totalorder %s54, %s55
      %p64 = scmp.eq.s32.totalorder %s23, 0
      %p65 = por %p63, %p64
      %p66 = scmp.ne.s32.totalorder %s54, %s55
      %p67 = scmp.eq.s32.totalorder %s24, 1
      %p68 = por %p66, %p67
      %p70 = scmp.ne.s32.totalorder %s55, %s69
      %p71 = scmp.eq.s32.totalorder %s24, 0
      %p72 = por %p70, %p71
      %s74 = sadd.s32 %s73, 1
      %p77 = scmp.eq.s32.totalorder %s18, 1
      %p78 = scmp.ne.s32.totalorder %s73, %s75
      %p79 = scmp.eq.s32.totalorder %s18, 0
      %p80 = por %p78, %p79
      %p81 = scmp.ne.s32.totalorder %s73, %s75
      %p82 = scmp.eq.s32.totalorder %s23, 1
      %p83 = por %p81, %p82
      %p84 = scmp.ne.s32.totalorder %s75, %s76
      %p85 = scmp.eq.s32.totalorder %s23, 0
      %p86 = por %p84, %p85
      %p87 = scmp.ne.s32.totalorder %s75, %s76
      %p88 = scmp.eq.s32.totalorder %s24, 1
      %p89 = por %p87, %p88
      %p91 = scmp.ne.s32.totalorder %s76, %s90
      %p92 = scmp.eq.s32.totalorder %s24, 0
      %p93 = por %p91, %p92
      %s95 = sadd.s32 %s94, 1
      %p98 = scmp.eq.s32.totalorder %s18, 1
      %p99 = scmp.ne.s32.totalorder %s94, %s96
      %p100 = scmp.eq.s32.totalorder %s18, 0
      %p101 = por %p99, %p100
      %p102 = scmp.ne.s32.totalorder %s94, %s96
      %p103 = scmp.eq.s32.totalorder %s23, 1
      %p104 = por %p102, %p103
      %p105 = scmp.ne.s32.totalorder %s96, %s97
      %p106 = scmp.eq.s32.totalorder %s23, 0
      %p107 = por %p105, %p106
      %p108 = scmp.ne.s32.totalorder %s96, %s97
      %p109 = scmp.eq.s32.totalorder %s24, 1
      %p110 = por %p108, %p109
      %p112 = scmp.ne.s32.totalorder %s97, %s111
      %p113 = scmp.eq.s32.totalorder %s24, 0
      %p114 = por %p112, %p113
      %s116 = sadd.s32 %s115, 1
      %p119 = scmp.eq.s32.totalorder %s18, 1
      %p120 = scmp.ne.s32.totalorder %s115, %s117
      %p121 = scmp.eq.s32.totalorder %s18, 0
      %p122 = por %p120, %p121
      %p123 = scmp.ne.s32.totalorder %s115, %s117
      %p124 = scmp.eq.s32.totalorder %s23, 1
      %p125 = por %p123, %p124
      %p126 = scmp.ne.s32.totalorder %s117, %s118
      %p127 = scmp.eq.s32.totalorder %s23, 0
      %p128 = por %p126, %p127
      %p129 = scmp.ne.s32.totalorder %s117, %s118
      %p130 = scmp.eq.s32.totalorder %s24, 1
      %p131 = por %p129, %p130
      %p133 = scmp.ne.s32.totalorder %s118, %s132
      %p134 = scmp.eq.s32.totalorder %s24, 0
      %p135 = por %p133, %p134
      %s136 = ssub.s32 %s18, %s25
      %p137 = scmp.eq.s32.totalorder %s136, 0
      %s139 = sadd.s32 %s138, 1
      %s140 = scalar_select %p137, %s138, %s139
      %p143 = pneg %p137
      %p144 = scmp.eq.s32.totalorder %s18, 1
      %p145 = por %p143, %p144
      %p146 = scmp.ne.s32.totalorder %s138, %s141
      %p147 = scmp.eq.s32.totalorder %s18, 0
      %p148 = por %p146, %p147
      %p149 = scmp.ne.s32.totalorder %s138, %s141
      %p150 = scmp.eq.s32.totalorder %s23, 1
      %p151 = por %p149, %p150
      %p152 = scmp.ne.s32.totalorder %s141, %s142
      %p153 = scmp.eq.s32.totalorder %s23, 0
      %p154 = por %p152, %p153
      %p155 = scmp.ne.s32.totalorder %s141, %s142
      %p156 = scmp.eq.s32.totalorder %s24, 1
      %p157 = por %p155, %p156
      %p159 = scmp.ne.s32.totalorder %s142, %s158
      %p160 = scmp.eq.s32.totalorder %s24, 0
      %p161 = por %p159, %p160
      %p162 = scmp.le.s32.totalorder 1, %s18
      %p163 = scmp.lt.s32.totalorder %s18, 3
      %p164 = pnand %p162, %p163
      %p165 = pneg %p164
      // Predicated region
      $region9: #{tpu_custom_call.1} parent=5 // pred_check
        _
      $region10: #{tpu_custom_call.1} parent=5 // pred_check_branch
        %167 = sbr.rel (%p164) target = $region12
      $region11: #{tpu_custom_call.1} parent=5 // pred_region
        %s168 = ssub.s32 %s18, 1
        // Predicated region
        $region13: #{tpu_custom_call.1} parent=11 // pred_check
          %p169 = pneg %p65
        $region14: #{tpu_custom_call.1} parent=11 // pred_check_branch
          %171 = sbr.rel (%p169) target = $region16
        $region15: #{tpu_custom_call.1} parent=11 // pred_region
          %s173 = ssub.s32 2304, 2304
          %174 = vsyncadd [#allocation6], %s173
          %s175 = sshll.u32 [#allocation5], 4
          %s176 = int_to_ptr.vmem [resolvable:$true] %s175
          %181 = dma.hbm_to_vmem [thread:$0]  %s1, 2304, %s176, [#allocation6], 256, 256, 16
        $region16: #{tpu_custom_call.1} parent=11 // pred_fallthru
          _
        // Predicated region
        $region17: #{tpu_custom_call.1} parent=11 // pred_check
          %p182 = pneg %p86
        $region18: #{tpu_custom_call.1} parent=11 // pred_check_branch
          %184 = sbr.rel (%p182) target = $region20
        $region19: #{tpu_custom_call.1} parent=11 // pred_region
          _
        $region20: #{tpu_custom_call.1} parent=11 // pred_fallthru
          _
        // Predicated region
        $region21: #{tpu_custom_call.1} parent=11 // pred_check
          %p185 = pneg %p107
        $region22: #{tpu_custom_call.1} parent=11 // pred_check_branch
          %187 = sbr.rel (%p185) target = $region24
        $region23: #{tpu_custom_call.1} parent=11 // pred_region
          _
        $region24: #{tpu_custom_call.1} parent=11 // pred_fallthru
          _
        // Predicated region
        $region25: #{tpu_custom_call.1} parent=11 // pred_check
          %p188 = pneg %p128
        $region26: #{tpu_custom_call.1} parent=11 // pred_check_branch
          %190 = sbr.rel (%p188) target = $region28
        $region27: #{tpu_custom_call.1} parent=11 // pred_region
          _
        $region28: #{tpu_custom_call.1} parent=11 // pred_fallthru
          _
      $region12: #{tpu_custom_call.1} parent=5 // pred_fallthru
        _
      %p191 = scmp.lt.s32.totalorder %s18, 2
      // Predicated region
      $region29: #{tpu_custom_call.1} parent=5 // pred_check
        %p192 = pneg %p191
      $region30: #{tpu_custom_call.1} parent=5 // pred_check_branch
        %194 = sbr.rel (%p192) target = $region32
      $region31: #{tpu_custom_call.1} parent=5 // pred_region
        // Predicated region
        $region33: #{tpu_custom_call.1} parent=31 // pred_check
          %p195 = pneg %p38
        $region34: #{tpu_custom_call.1} parent=31 // pred_check_branch
          %197 = sbr.rel (%p195) target = $region36
        $region35: #{tpu_custom_call.1} parent=31 // pred_region
          %s198 = sand.u32 %s28, 1
          %s199 = scalar_lea.sflag [#allocation3], %s198
          %s200 = sand.u32 %s28, 1
          %s201 = smul.addr %s200, 16
          %s202 = scalar_lea.vmem [#allocation2], %s201
          %s204 = ssub.s32 256, 256
          %205 = vsyncadd %s199, %s204
          %s206 = smul.addr %s18, 2
          %s207 = smul.addr %s206, 128
          %s208 = scalar_lea.hbm %s0, %s207
          %s210 = sshll.u32 %s202, 4
          %s211 = int_to_ptr.vmem [resolvable:$true] %s210
          %213 = dma.hbm_to_vmem [thread:$0]  %s208, 256, %s211, %s199
        $region36: #{tpu_custom_call.1} parent=31 // pred_fallthru
          _
      $region32: #{tpu_custom_call.1} parent=5 // pred_fallthru
        _
      %p214 = scmp.le.s32.totalorder 1, %s18
      %p215 = scmp.lt.s32.totalorder %s18, 3
      %p216 = pnand %p214, %p215
      %p217 = pneg %p216
      // Predicated region
      $region37: #{tpu_custom_call.1} parent=5 // pred_check
        _
      $region38: #{tpu_custom_call.1} parent=5 // pred_check_branch
        %219 = sbr.rel (%p216) target = $region40
      $region39: #{tpu_custom_call.1} parent=5 // pred_region
        %s220 = ssub.s32 %s18, 1
        %s221 = sand.u32 %s31, 1
        %s222 = scalar_lea.sflag [#allocation3], %s221
        %s223 = sand.u32 %s31, 1
        %s224 = smul.addr %s223, 16
        %s225 = scalar_lea.vmem [#allocation2], %s224
        // Predicated region
        $region41: #{tpu_custom_call.1} parent=39 // pred_check
          %p226 = pneg %p44
        $region42: #{tpu_custom_call.1} parent=39 // pred_check_branch
          %228 = sbr.rel (%p226) target = $region44
        $region43: #{tpu_custom_call.1} parent=39 // pred_region
          %229 = dma.done %s222, 256
        $region44: #{tpu_custom_call.1} parent=39 // pred_fallthru
          _
        // Predicated region
        $region45: #{tpu_custom_call.1} parent=39 // pred_check
          %p230 = pneg %p65
        $region46: #{tpu_custom_call.1} parent=39 // pred_check_branch
          %232 = sbr.rel (%p230) target = $region48
        $region47: #{tpu_custom_call.1} parent=39 // pred_region
          %233 = dma.done [#allocation6], 2304
        $region48: #{tpu_custom_call.1} parent=39 // pred_fallthru
          _
        %s234 = sand.u32 %s31, 1
        %s235 = scalar_lea.sflag [#allocation3], %s234
        %s236 = sand.u32 %s31, 1
        %s237 = smul.addr %s236, 16
        %s238 = scalar_lea.vmem [#allocation2], %s237
        %p239 = pneg %p44
        %p240 = pneg %p41
        %p241 = pneg %p65
        %p242 = pneg %p62
        %p243 = pneg %p86
        %p244 = pneg %p83
        %p245 = pneg %p107
        %p246 = pneg %p104
        %p247 = pneg %p128
        %p248 = pneg %p125
        %p249 = pneg %p154
        %p250 = pneg %p151
        %s251 = sand.u32 %s141, 1
        %s252 = scalar_lea.sflag [#allocation4], %s251
        %s253 = sand.u32 %s141, 1
        %s254 = smul.addr %s253, 16
        %s255 = scalar_lea.vmem [#allocation7], %s254
        %v256 = vld [vmem:[%s225] sm:$0xff]
        %v257 = vld [vmem:[%s225 + $0x8] sm:$0xff]
        %259 = vrot.lane.b32.xlu0 %v257, 17
        %v260 = vpop.permute.xlu0 %259
        %263 = vrot.lane.b32.xlu0 %v256, 17
        %v264 = vpop.permute.xlu0 %263
        %vm265 = vcmask 138240
        %v266 = vsel %vm265, %v264, %v260
        %v269 = vsel %vm265, %v260, %v264
        %v270 = vld [vmem:[#allocation5] sm:$0xff]
        %v271 = vld [vmem:[#allocation5 + $0x8] sm:$0xff]
        %v272 = vmul.f32 %v269, %v270
        %v273 = vmul.f32 %v266, %v271
        %274 = vrot.lane.b32.xlu0 %v257, 16
        %v275 = vpop.permute.xlu0 %274
        %277 = vrot.lane.b32.xlu0 %v256, 16
        %v278 = vpop.permute.xlu0 %277
        %vm279 = vcmask 130048
        %v280 = vsel %vm279, %v278, %v275
        %v283 = vsel %vm279, %v275, %v278
        %s284 = scalar_lea.vmem [#allocation5], 16
        %v285 = vld [vmem:[%s284] sm:$0xff]
        %v286 = vld [vmem:[%s284 + $0x8] sm:$0xff]
        %v287 = vmul.f32 %v283, %v285
        %v288 = vmul.f32 %v280, %v286
        %v289 = vadd.f32 %v272, %v287
        %v290 = vadd.f32 %v273, %v288
        %291 = vrot.lane.b32.xlu0 %v257, 15
        %v292 = vpop.permute.xlu0 %291
        %294 = vrot.lane.b32.xlu0 %v256, 15
        %v295 = vpop.permute.xlu0 %294
        %vm296 = vcmask 121856
        %v297 = vsel %vm296, %v295, %v292
        %v300 = vsel %vm296, %v292, %v295
        %s301 = scalar_lea.vmem [#allocation5], 32
        %v302 = vld [vmem:[%s301] sm:$0xff]
        %v303 = vld [vmem:[%s301 + $0x8] sm:$0xff]
        %v304 = vmul.f32 %v300, %v302
        %v305 = vmul.f32 %v297, %v303
        %v306 = vadd.f32 %v289, %v304
        %v307 = vadd.f32 %v290, %v305
        %308 = vrot.lane.b32.xlu0 %v257, 1
        %v309 = vpop.permute.xlu0 %308
        %311 = vrot.lane.b32.xlu0 %v256, 1
        %v312 = vpop.permute.xlu0 %311
        %vm313 = vcmask 7168
        %v314 = vsel %vm313, %v312, %v309
        %v317 = vsel %vm313, %v309, %v312
        %s318 = scalar_lea.vmem [#allocation5], 48
        %v319 = vld [vmem:[%s318] sm:$0xff]
        %v320 = vld [vmem:[%s318 + $0x8] sm:$0xff]
        %v321 = vmul.f32 %v317, %v319
        %v322 = vmul.f32 %v314, %v320
        %v323 = vadd.f32 %v306, %v321
        %v324 = vadd.f32 %v307, %v322
        %s325 = scalar_lea.vmem [#allocation5], 64
        %v326 = vld [vmem:[%s325] sm:$0xff]
        %v327 = vld [vmem:[%s325 + $0x8] sm:$0xff]
        %v328 = vmul.f32 %v256, %v326
        %v329 = vmul.f32 %v257, %v327
        %v330 = vadd.f32 %v323, %v328
        %v331 = vadd.f32 %v324, %v329
        %332 = vrot.lane.b32.xlu0 %v256, 127
        %v333 = vpop.permute.xlu0 %332
        %334 = vrot.lane.b32.xlu0 %v257, 127
        %v335 = vpop.permute.xlu0 %334
        %vm336 = vcmask 1039360
        %v337 = vsel %vm336, %v333, %v335
        %v341 = vsel %vm336, %v335, %v333
        %s342 = scalar_lea.vmem [#allocation5], 80
        %v343 = vld [vmem:[%s342] sm:$0xff]
        %v344 = vld [vmem:[%s342 + $0x8] sm:$0xff]
        %v345 = vmul.f32 %v337, %v343
        %v346 = vmul.f32 %v341, %v344
        %v347 = vadd.f32 %v330, %v345
        %v348 = vadd.f32 %v331, %v346
        %349 = vrot.lane.b32.xlu0 %v256, 113
        %v350 = vpop.permute.xlu0 %349
        %351 = vrot.lane.b32.xlu0 %v257, 113
        %v352 = vpop.permute.xlu0 %351
        %vm353 = vcmask 924672
        %v354 = vsel %vm353, %v350, %v352
        %v358 = vsel %vm353, %v352, %v350
        %s359 = scalar_lea.vmem [#allocation5], 96
        %v360 = vld [vmem:[%s359] sm:$0xff]
        %v361 = vld [vmem:[%s359 + $0x8] sm:$0xff]
        %v362 = vmul.f32 %v354, %v360
        %v363 = vmul.f32 %v358, %v361
        %v364 = vadd.f32 %v347, %v362
        %v365 = vadd.f32 %v348, %v363
        %366 = vrot.lane.b32.xlu0 %v256, 112
        %v367 = vpop.permute.xlu0 %366
        %368 = vrot.lane.b32.xlu0 %v257, 112
        %v369 = vpop.permute.xlu0 %368
        %vm370 = vcmask 916480
        %v371 = vsel %vm370, %v367, %v369
        %v375 = vsel %vm370, %v369, %v367
        %s376 = scalar_lea.vmem [#allocation5], 112
        %v377 = vld [vmem:[%s376] sm:$0xff]
        %v378 = vld [vmem:[%s376 + $0x8] sm:$0xff]
        %v379 = vmul.f32 %v371, %v377
        %v380 = vmul.f32 %v375, %v378
        %v381 = vadd.f32 %v364, %v379
        %v382 = vadd.f32 %v365, %v380
        %383 = vrot.lane.b32.xlu0 %v256, 111
        %v384 = vpop.permute.xlu0 %383
        %385 = vrot.lane.b32.xlu0 %v257, 111
        %v386 = vpop.permute.xlu0 %385
        %vm387 = vcmask 908288
        %v388 = vsel %vm387, %v384, %v386
        %v392 = vsel %vm387, %v386, %v384
        %s393 = scalar_lea.vmem [#allocation5], 128
        %v394 = vld [vmem:[%s393] sm:$0xff]
        %v395 = vld [vmem:[%s393 + $0x8] sm:$0xff]
        %v396 = vmul.f32 %v388, %v394
        %v397 = vmul.f32 %v392, %v395
        %v398 = vadd.f32 %v381, %v396
        %v399 = vadd.f32 %v382, %v397
        %v400 = vld [vmem:[%s2] sm:$0xff]
        %402 = vset.pattern.permute.xlu0 0
        %403 = vperm.xlu0 %402, %v400
        %v404 = vpop.permute.xlu0 %403
        %v406 = vadd.f32 %v398, %v404
        %v407 = vadd.f32 %v399, %v404
        %v408 = vmul.f32 %v406, 0.5
        %v409 = vmul.f32 %v407, 0.5
        %v410 = vmul.f32 %v406, 0.70710677
        %v411 = vmul.f32 %v407, 0.70710677
        %v412 = verf.f32.pop %v410
        %v413 = verf.f32.pop %v411
        %v414 = vadd.f32 %v412, 1.0
        %v415 = vadd.f32 %v413, 1.0
        %v416 = vmul.f32 %v408, %v414
        %v417 = vmul.f32 %v409, %v415
        %v418 = vld [vmem:[%s3] sm:$0xff]
        %v419 = vld [vmem:[%s4] sm:$0xff]
        %421 = vset.pattern.permute.xlu0 0
        %422 = vperm.xlu0 %421, %v419
        %v423 = vpop.permute.xlu0 %422
        %vm425 = vcmask 64512
        %v427 = vsel %vm425, %v418, 0
        %429 = vmatprep.subr.mxu0 0.0
        %430 = vmatpush1.msra.mxu0 0.0
        %431 = vmatprep.subr.mxu0 0.0
        %432 = vmatpush1.msra.mxu0 0.0
        %433 = vmatprep.subr.mxu0 0.0
        %434 = vmatpush1.msra.mxu0 0.0
        %435 = vmatprep.subr.mxu0 0.0
        %436 = vmatpush1.msra.mxu0 0.0
        %437 = vmatprep.subr.mxu0 0.0
        %438 = vmatpush1.msra.mxu0 0.0
        %439 = vmatprep.subr.mxu0 0.0
        %440 = vmatpush1.msra.mxu0 0.0
        %441 = vmatprep.subr.mxu0 0.0
        %442 = vmatpush1.msra.mxu0 0.0
        %443 = vmatprep.subr.mxu0 0.0
        %444 = vmatpush1.msra.mxu0 0.0
        %445 = vmatprep.subr.mxu0 0.0
        %446 = vmatpush1.msra.mxu0 0.0
        %447 = vmatprep.subr.mxu0 0.0
        %448 = vmatpush1.msra.mxu0 0.0
        %449 = vmatprep.subr.mxu0 0.0
        %450 = vmatpush1.msra.mxu0 0.0
        %451 = vmatprep.subr.mxu0 0.0
        %452 = vmatpush1.msra.mxu0 0.0
        %453 = vmatprep.subr.mxu0 0.0
        %454 = vmatpush1.msra.mxu0 0.0
        %455 = vmatprep.subr.mxu0 0.0
        %456 = vmatpush1.msra.mxu0 0.0
        %457 = vmatprep.subr.mxu0 0.0
        %458 = vmatpush1.msra.mxu0 0.0
        %459 = vmatprep.subr.mxu0 %v417
        %460 = vmatpush1.msra.mxu0 %v416
        %461 = vmatprep.subr.mxu0 0.0
        %462 = vmatpush2.msra.mxu0 0.0
        %463 = vmatprep.subr.mxu0 0.0
        %464 = vmatpush2.msra.mxu0 0.0
        %465 = vmatprep.subr.mxu0 0.0
        %466 = vmatpush2.msra.mxu0 0.0
        %467 = vmatprep.subr.mxu0 0.0
        %468 = vmatpush2.msra.mxu0 0.0
        %469 = vmatprep.subr.mxu0 0.0
        %470 = vmatpush2.msra.mxu0 0.0
        %471 = vmatprep.subr.mxu0 0.0
        %472 = vmatpush2.msra.mxu0 0.0
        %473 = vmatprep.subr.mxu0 0.0
        %474 = vmatpush2.msra.mxu0 0.0
        %475 = vmatprep.subr.mxu0 0.0
        %476 = vmatpush2.msra.mxu0 0.0
        %477 = vmatprep.subr.mxu0 0.0
        %478 = vmatpush2.msra.mxu0 0.0
        %479 = vmatprep.subr.mxu0 0.0
        %480 = vmatpush2.msra.mxu0 0.0
        %481 = vmatprep.subr.mxu0 0.0
        %482 = vmatpush2.msra.mxu0 0.0
        %483 = vmatprep.subr.mxu0 0.0
        %484 = vmatpush2.msra.mxu0 0.0
        %485 = vmatprep.subr.mxu0 0.0
        %486 = vmatpush2.msra.mxu0 0.0
        %487 = vmatprep.subr.mxu0 0.0
        %488 = vmatpush2.msra.mxu0 0.0
        %489 = vmatprep.subr.mxu0 0.0
        %490 = vmatpush2.msra.mxu0 0.0
        %491 = vmatprep.subr.mxu0 0.0
        %492 = vmatpush2.msra.mxu0 0.0
        %493 = vmatprep.mubr.f32.mxu0 0.0
        %494 = vmatmul.mubr.f32.gmra.mxu0 %v427
        %v495 = vpop.f32.mrf.mxu0
        %v496 = vadd.f32 %v423, %v495
        %v497 = vpop.f32.mrf.mxu0
        %v498 = vadd.f32 %v423, %v497
        %499 = vdwg.mxu0
        %500 = vst [vmem:[%s255] sm:$0xff] %v496
        %501 = vst [vmem:[%s255 + $0x8] sm:$0xff] %v498
        %s502 = sand.u32 %s141, 1
        %s503 = scalar_lea.sflag [#allocation4], %s502
        %s504 = sand.u32 %s141, 1
        %s505 = smul.addr %s504, 16
        %s506 = scalar_lea.vmem [#allocation7], %s505
        // Predicated region
        $region49: #{tpu_custom_call.1} parent=39 // pred_check
          %p507 = pneg %p151
        $region50: #{tpu_custom_call.1} parent=39 // pred_check_branch
          %509 = sbr.rel (%p507) target = $region52
        $region51: #{tpu_custom_call.1} parent=39 // pred_region
          %s511 = ssub.s32 256, 256
          %512 = vsyncadd %s503, %s511
          %s513 = smul.addr %s23, 2
          %s514 = smul.addr %s513, 128
          %s515 = scalar_lea.hbm %s5, %s514
          %s517 = sshll.u32 %s506, 4
          %s518 = int_to_ptr.vmem [resolvable:$true] %s517
          %520 = dma.vmem_to_hbm [thread:$0]  %s518, 256, %s515, %s503
        $region52: #{tpu_custom_call.1} parent=39 // pred_fallthru
          _
      $region40: #{tpu_custom_call.1} parent=5 // pred_fallthru
        _
      %p521 = scmp.le.s32.totalorder 2, %s18
      // Predicated region
      $region53: #{tpu_custom_call.1} parent=5 // pred_check
        %p522 = pneg %p521
      $region54: #{tpu_custom_call.1} parent=5 // pred_check_branch
        %524 = sbr.rel (%p522) target = $region56
      $region55: #{tpu_custom_call.1} parent=5 // pred_region
        %s525 = ssub.s32 %s18, 2
        // Predicated region
        $region57: #{tpu_custom_call.1} parent=55 // pred_check
          %p526 = pneg %p157
        $region58: #{tpu_custom_call.1} parent=55 // pred_check_branch
          %528 = sbr.rel (%p526) target = $region60
        $region59: #{tpu_custom_call.1} parent=55 // pred_region
          %s529 = sand.u32 %s142, 1
          %s530 = scalar_lea.sflag [#allocation4], %s529
          %s531 = sand.u32 %s142, 1
          %s532 = smul.addr %s531, 16
          %s533 = scalar_lea.vmem [#allocation7], %s532
          %534 = dma.done %s530, 256
        $region60: #{tpu_custom_call.1} parent=55 // pred_fallthru
          _
      $region56: #{tpu_custom_call.1} parent=5 // pred_fallthru
        _
    $region6: #{tpu_custom_call.1} parent=1 // loop_footer
      %s22 = sadd.s32 1, %s18
    $region7: #{tpu_custom_call.1} parent=1 // loop_footer_branch
      %17 = sbr.rel target = $region3
    $region8: #{tpu_custom_call.1} parent=1 // loop_exit
      _
    %535 = vsyncpa [#allocation3], 1
    %s536 = scalar_lea.sflag [#allocation3], 1
    %537 = vsyncpa %s536, 1
    %538 = vsyncpa [#allocation6], 1
    %539 = vsyncpa [#allocation4], 1
    %s540 = scalar_lea.sflag [#allocation4], 1
    %541 = vsyncpa %s540, 1

</llo_original>
